<compile_context>
chip_gen: v7x
topology: tpu7x:2x2x1
jax: 0.10.0
libtpu: 0.0.40
codegen_flags: <defaults>
</compile_context>

<pallas_src>
import functools

import jax
import jax.numpy as jnp
from jax.experimental import pallas as pl
from jax.experimental.pallas import tpu as pltpu

OUT_W = 8        # padded FC-output rows (>= 2 real logits), sublane-aligned
BIAS_COLS = 8    # packed-bias lane width (col 0: layer0, col 1: layer1, col 2: fc)


def _round_up(n, m):
    return ((n + m - 1) // m) * m


def _cdiv(a, b):
    return -(-a // b)


def _make_kernel(hidden_dim):
    H = hidden_dim

    def kernel(x_ref, w0_ref, w1_ref, wfc_ref, b_ref, out_ref):
        b = b_ref[...]                                   # (4H, BIAS_COLS) f32

        def cell(gates):                                 # (4H, TB) f32, rows [i, f, g, o]
            i_g = jax.nn.sigmoid(gates[0 * H:1 * H, :])
            # f-gate multiplies c0 == 0, so it drops out exactly.
            g_g = jnp.tanh(gates[2 * H:3 * H, :])
            o_g = jax.nn.sigmoid(gates[3 * H:4 * H, :])
            return o_g * jnp.tanh(i_g * g_g)             # (H, TB) f32

        g0 = jnp.dot(w0_ref[...], x_ref[...],
                     preferred_element_type=jnp.float32) + b[:, 0:1]
        h0 = cell(g0)
        g1 = jnp.dot(w1_ref[...], h0.astype(w1_ref.dtype),
                     preferred_element_type=jnp.float32) + b[:, 1:2]
        h1 = cell(g1)
        logits = jnp.dot(wfc_ref[...], h1.astype(wfc_ref.dtype),
                         preferred_element_type=jnp.float32) + b[0:OUT_W, 2:3]
        out_ref[...] = logits.astype(out_ref.dtype)      # (OUT_W, TB) lane-dense

    return kernel


def _choose_tiles(B, block_b):
    """Lane-aligned batch tile (multiple of 128); >=2 tiles when the batch is
    large enough (keeps both v7x TensorCores busy); minimal round-up padding."""
    Bp128 = _round_up(B, 128)
    n = max(1, _cdiv(Bp128, block_b))
    if n == 1 and Bp128 >= 256:
        n = 2
    TB = _round_up(_cdiv(Bp128, n), 128)
    return TB, n * TB, n


def lstm_classifier_forward(x, packed, hidden_dim, *, block_b=2048):
    """x: (B, D) float32, packed = pack_params(...). Returns (B, 2) float32."""
    B, D = x.shape
    H = hidden_dim
    w0, w1, wfc, biases = packed["w0"], packed["w1"], packed["wfc"], packed["biases"]
    Dp = w0.shape[1]
    TB, Bp, n_tiles = _choose_tiles(B, block_b)

    # Transposed, zero-padded, bf16 activations: (Dp, Bp), batch on lanes.
    xT = jnp.pad(x.astype(w0.dtype).T, ((0, Dp - D), (0, Bp - B)))

    const = lambda i: (0, 0)   # weights / biases: same block every step -> VMEM resident

    flops = 2 * Bp * (4 * H * Dp + 4 * H * H + OUT_W * H)
    transcendentals = 8 * H * Bp
    bytes_accessed = (2 * (Dp * Bp + 4 * H * Dp + 4 * H * H + OUT_W * H)  # bf16 x + weights
                      + 4 * (4 * H * BIAS_COLS)                           # f32 biases
                      + 4 * OUT_W * Bp)                                   # f32 logits^T

    out = pl.pallas_call(
        _make_kernel(H),
        out_shape=jax.ShapeDtypeStruct((OUT_W, Bp), jnp.float32),
        grid=(n_tiles,),
        in_specs=[
            pl.BlockSpec((Dp, TB), lambda i: (0, i)),       # x^T batch tile
            pl.BlockSpec((4 * H, Dp), const),               # layer-0 weights (bf16)
            pl.BlockSpec((4 * H, H), const),                # layer-1 weights (bf16)
            pl.BlockSpec((OUT_W, H), const),                # FC weights, rows 0:2 real
            pl.BlockSpec((4 * H, BIAS_COLS), const),        # packed biases (f32)
        ],
        out_specs=pl.BlockSpec((OUT_W, TB), lambda i: (0, i)),
        compiler_params=pltpu.CompilerParams(
            dimension_semantics=("parallel",)),
        cost_estimate=pl.CostEstimate(
            flops=flops, transcendentals=transcendentals,
            bytes_accessed=bytes_accessed),
    )(xT, w0, w1, wfc, biases)

    return out[:2, :B].T                                    # (B, 2) logits


def init_params(key, input_dim, hidden_dim):
    """Deterministic synthetic parameters matching the PyTorch module shapes."""
    ks = jax.random.split(key, 8)
    H, D = hidden_dim, input_dim
    scale = 0.1
    return {
        "w_ih0": scale * jax.random.normal(ks[0], (4 * H, D), jnp.float32),
        "b_ih0": scale * jax.random.normal(ks[1], (4 * H,), jnp.float32),
        "b_hh0": scale * jax.random.normal(ks[2], (4 * H,), jnp.float32),
        "w_ih1": scale * jax.random.normal(ks[3], (4 * H, H), jnp.float32),
        "b_ih1": scale * jax.random.normal(ks[4], (4 * H,), jnp.float32),
        "b_hh1": scale * jax.random.normal(ks[5], (4 * H,), jnp.float32),
        "w_fc": scale * jax.random.normal(ks[6], (2, H), jnp.float32),
        "b_fc": scale * jax.random.normal(ks[7], (2,), jnp.float32),
    }


def pack_params(params, input_dim, hidden_dim, dtype=jnp.bfloat16):
    """Host-side repack for the transposed kernel: bf16 weights, input dim padded
    for bf16 sublane packing, FC rows padded to OUT_W, all biases (f32) merged
    into one (4H, BIAS_COLS) column-packed operand."""
    H, D = hidden_dim, input_dim
    assert H % 8 == 0, "hidden_dim must be sublane-aligned (multiple of 8)"
    Dp = _round_up(D, 16)   # bf16 sublane packing on the contraction dim

    w0 = jnp.zeros((4 * H, Dp), jnp.float32).at[:, :D].set(params["w_ih0"])
    wfc = jnp.zeros((OUT_W, H), jnp.float32).at[:2, :].set(params["w_fc"])

    bfc = jnp.zeros((4 * H,), jnp.float32).at[:2].set(params["b_fc"])
    biases = (jnp.zeros((4 * H, BIAS_COLS), jnp.float32)
              .at[:, 0].set(params["b_ih0"] + params["b_hh0"])
              .at[:, 1].set(params["b_ih1"] + params["b_hh1"])
              .at[:, 2].set(bfc))

    return {
        "w0": w0.astype(dtype),                  # (4H, Dp)
        "w1": params["w_ih1"].astype(dtype),     # (4H, H)
        "wfc": wfc.astype(dtype),                # (OUT_W, H)
        "biases": biases,                        # (4H, BIAS_COLS) f32
    }


def reference_forward(x, params, hidden_dim):
    """Pure-JAX f32 reference with the original PyTorch-shaped parameters."""
    H = hidden_dim

    def cell(inp, w_ih, b_ih, b_hh):
        gates = inp @ w_ih.T + b_ih + b_hh
        i = jax.nn.sigmoid(gates[:, 0 * H:1 * H])
        g = jnp.tanh(gates[:, 2 * H:3 * H])
        o = jax.nn.sigmoid(gates[:, 3 * H:4 * H])
        return o * jnp.tanh(i * g)

    h0 = cell(x, params["w_ih0"], params["b_ih0"], params["b_hh0"])
    h1 = cell(h0, params["w_ih1"], params["b_ih1"], params["b_hh1"])
    return h1 @ params["w_fc"].T + params["b_fc"]


if __name__ == "__main__":
    # config = {'model': {'hidden_dim': 32, 'num_layers': 2}}
    BATCH, INPUT_DIM, HIDDEN_DIM = 8, 16, 32

    key = jax.random.PRNGKey(0)
    k_x, k_p = jax.random.split(key)
    x = jax.random.normal(k_x, (BATCH, INPUT_DIM), jnp.float32)
    params = init_params(k_p, INPUT_DIM, HIDDEN_DIM)
    packed = pack_params(params, INPUT_DIM, HIDDEN_DIM)

    fwd = jax.jit(functools.partial(lstm_classifier_forward, hidden_dim=HIDDEN_DIM))
    out = fwd(x, packed)
    out = jax.block_until_ready(out)

    ref = reference_forward(x, params, HIDDEN_DIM)
    assert out.shape == (BATCH, 2)
    # bf16 weights / activations vs. f32 reference -> loosened tolerance.
    assert jnp.allclose(out, ref, atol=2e-2, rtol=2e-2), "mismatch vs reference"

    print("KERNEL_OK")
</pallas_src>

<mosaic_0001>
module attributes {stable_mosaic.version = 11 : i64} {
  func.func @kernel(%arg0: i32, %arg1: memref<16x128xbf16, #tpu.memory_space<vmem>>, %arg2: memref<128x16xbf16, #tpu.memory_space<vmem>>, %arg3: memref<128x32xbf16, #tpu.memory_space<vmem>>, %arg4: memref<8x32xbf16, #tpu.memory_space<vmem>>, %arg5: memref<128x8xf32, #tpu.memory_space<vmem>>, %arg6: memref<8x128xf32, #tpu.memory_space<vmem>>) attributes {dimension_semantics = [#tpu.dimension_semantics<parallel>], iteration_bounds = array<i64: 1>, scalar_prefetch = 0 : i64, scratch_operands = 0 : i64, tpu.core_type = #tpu.core_type<tc>, window_params = [{transform_indices = @transform_0, window_bounds = array<i64: 16, 128>}, {pipeline_mode = #tpu.pipeline_mode<synchronous>, transform_indices = @transform_1, window_bounds = array<i64: 128, 16>}, {pipeline_mode = #tpu.pipeline_mode<synchronous>, transform_indices = @transform_2, window_bounds = array<i64: 128, 32>}, {pipeline_mode = #tpu.pipeline_mode<synchronous>, transform_indices = @transform_3, window_bounds = array<i64: 8, 32>}, {pipeline_mode = #tpu.pipeline_mode<synchronous>, transform_indices = @transform_4, window_bounds = array<i64: 128, 8>}, {transform_indices = @transform_5, window_bounds = array<i64: 8, 128>}]} {
    %c0 = arith.constant 0 : index
    %c0_0 = arith.constant 0 : index
    %0 = vector.load %arg5[%c0, %c0_0] : memref<128x8xf32, #tpu.memory_space<vmem>>, vector<128x8xf32>
    %c0_1 = arith.constant 0 : index
    %c0_2 = arith.constant 0 : index
    %1 = vector.load %arg2[%c0_1, %c0_2] : memref<128x16xbf16, #tpu.memory_space<vmem>>, vector<128x16xbf16>
    %c0_3 = arith.constant 0 : index
    %c0_4 = arith.constant 0 : index
    %2 = vector.load %arg1[%c0_3, %c0_4] : memref<16x128xbf16, #tpu.memory_space<vmem>>, vector<16x128xbf16>
    %cst = arith.constant dense<0.000000e+00> : vector<128x128xf32>
    %3 = tpu.matmul %1, %2, %cst {dimension_numbers = #tpu.dot_dimension_numbers<[1], [0], [0], [1], [0, 0, 1, 1], [], []>} : vector<128x16xbf16>, vector<16x128xbf16>, vector<128x128xf32> -> vector<128x128xf32>
    %4 = vector.extract_strided_slice %0 {offsets = [0, 0], sizes = [128, 1], strides = [1, 1]} : vector<128x8xf32> to vector<128x1xf32>
    %5 = vector.broadcast %4 : vector<128x1xf32> to vector<128x128xf32>
    %6 = arith.addf %3, %5 : vector<128x128xf32>
    %7 = vector.extract_strided_slice %6 {offsets = [0, 0], sizes = [32, 128], strides = [1, 1]} : vector<128x128xf32> to vector<32x128xf32>
    %8 = arith.negf %7 : vector<32x128xf32>
    %9 = math.exp %8 : vector<32x128xf32>
    %cst_5 = arith.constant 1.000000e+00 : f32
    %10 = vector.broadcast %cst_5 : f32 to vector<32x128xf32>
    %11 = arith.addf %10, %9 : vector<32x128xf32>
    %12 = arith.divf %10, %11 : vector<32x128xf32>
    %13 = vector.extract_strided_slice %6 {offsets = [64, 0], sizes = [32, 128], strides = [1, 1]} : vector<128x128xf32> to vector<32x128xf32>
    %14 = math.tanh %13 : vector<32x128xf32>
    %15 = vector.extract_strided_slice %6 {offsets = [96, 0], sizes = [32, 128], strides = [1, 1]} : vector<128x128xf32> to vector<32x128xf32>
    %16 = arith.negf %15 : vector<32x128xf32>
    %17 = math.exp %16 : vector<32x128xf32>
    %cst_6 = arith.constant 1.000000e+00 : f32
    %18 = vector.broadcast %cst_6 : f32 to vector<32x128xf32>
    %19 = arith.addf %18, %17 : vector<32x128xf32>
    %20 = arith.divf %18, %19 : vector<32x128xf32>
    %21 = arith.mulf %12, %14 : vector<32x128xf32>
    %22 = math.tanh %21 : vector<32x128xf32>
    %23 = arith.mulf %20, %22 : vector<32x128xf32>
    %c0_7 = arith.constant 0 : index
    %c0_8 = arith.constant 0 : index
    %24 = vector.load %arg3[%c0_7, %c0_8] : memref<128x32xbf16, #tpu.memory_space<vmem>>, vector<128x32xbf16>
    %25 = arith.truncf %23 : vector<32x128xf32> to vector<32x128xbf16>
    %cst_9 = arith.constant dense<0.000000e+00> : vector<128x128xf32>
    %26 = tpu.matmul %24, %25, %cst_9 {dimension_numbers = #tpu.dot_dimension_numbers<[1], [0], [0], [1], [0, 0, 1, 1], [], []>} : vector<128x32xbf16>, vector<32x128xbf16>, vector<128x128xf32> -> vector<128x128xf32>
    %27 = vector.extract_strided_slice %0 {offsets = [0, 1], sizes = [128, 1], strides = [1, 1]} : vector<128x8xf32> to vector<128x1xf32>
    %28 = vector.broadcast %27 : vector<128x1xf32> to vector<128x128xf32>
    %29 = arith.addf %26, %28 : vector<128x128xf32>
    %30 = vector.extract_strided_slice %29 {offsets = [0, 0], sizes = [32, 128], strides = [1, 1]} : vector<128x128xf32> to vector<32x128xf32>
    %31 = arith.negf %30 : vector<32x128xf32>
    %32 = math.exp %31 : vector<32x128xf32>
    %cst_10 = arith.constant 1.000000e+00 : f32
    %33 = vector.broadcast %cst_10 : f32 to vector<32x128xf32>
    %34 = arith.addf %33, %32 : vector<32x128xf32>
    %35 = arith.divf %33, %34 : vector<32x128xf32>
    %36 = vector.extract_strided_slice %29 {offsets = [64, 0], sizes = [32, 128], strides = [1, 1]} : vector<128x128xf32> to vector<32x128xf32>
    %37 = math.tanh %36 : vector<32x128xf32>
    %38 = vector.extract_strided_slice %29 {offsets = [96, 0], sizes = [32, 128], strides = [1, 1]} : vector<128x128xf32> to vector<32x128xf32>
    %39 = arith.negf %38 : vector<32x128xf32>
    %40 = math.exp %39 : vector<32x128xf32>
    %cst_11 = arith.constant 1.000000e+00 : f32
    %41 = vector.broadcast %cst_11 : f32 to vector<32x128xf32>
    %42 = arith.addf %41, %40 : vector<32x128xf32>
    %43 = arith.divf %41, %42 : vector<32x128xf32>
    %44 = arith.mulf %35, %37 : vector<32x128xf32>
    %45 = math.tanh %44 : vector<32x128xf32>
    %46 = arith.mulf %43, %45 : vector<32x128xf32>
    %c0_12 = arith.constant 0 : index
    %c0_13 = arith.constant 0 : index
    %47 = vector.load %arg4[%c0_12, %c0_13] : memref<8x32xbf16, #tpu.memory_space<vmem>>, vector<8x32xbf16>
    %48 = arith.truncf %46 : vector<32x128xf32> to vector<32x128xbf16>
    %cst_14 = arith.constant dense<0.000000e+00> : vector<8x128xf32>
    %49 = tpu.matmul %47, %48, %cst_14 {dimension_numbers = #tpu.dot_dimension_numbers<[1], [0], [0], [1], [0, 0, 1, 1], [], []>} : vector<8x32xbf16>, vector<32x128xbf16>, vector<8x128xf32> -> vector<8x128xf32>
    %50 = vector.extract_strided_slice %0 {offsets = [0, 2], sizes = [8, 1], strides = [1, 1]} : vector<128x8xf32> to vector<8x1xf32>
    %51 = vector.broadcast %50 : vector<8x1xf32> to vector<8x128xf32>
    %52 = arith.addf %49, %51 : vector<8x128xf32>
    %c0_15 = arith.constant 0 : index
    %c0_16 = arith.constant 0 : index
    %53 = vector.load %arg6[%c0_15, %c0_16] : memref<8x128xf32, #tpu.memory_space<vmem>>, vector<8x128xf32>
    tpu.vector_store %arg6[%c0_15, %c0_16], %52 {strides = array<i32>} : memref<8x128xf32, #tpu.memory_space<vmem>>, vector<8x128xf32>,
    return
  }
  func.func @transform_0(%arg0: i32) -> (i32, i32) {
    %c0_i32 = arith.constant 0 : i32
    %c0_i32_0 = arith.constant 0 : i32
    return %c0_i32, %arg0 : i32, i32
  }
  func.func @transform_1(%arg0: i32) -> (i32, i32) {
    %c0_i32 = arith.constant 0 : i32
    %c0_i32_0 = arith.constant 0 : i32
    %c0_i32_1 = arith.constant 0 : i32
    return %c0_i32, %c0_i32_0 : i32, i32
  }
  func.func @transform_2(%arg0: i32) -> (i32, i32) {
    %c0_i32 = arith.constant 0 : i32
    %c0_i32_0 = arith.constant 0 : i32
    %c0_i32_1 = arith.constant 0 : i32
    return %c0_i32, %c0_i32_0 : i32, i32
  }
  func.func @transform_3(%arg0: i32) -> (i32, i32) {
    %c0_i32 = arith.constant 0 : i32
    %c0_i32_0 = arith.constant 0 : i32
    %c0_i32_1 = arith.constant 0 : i32
    return %c0_i32, %c0_i32_0 : i32, i32
  }
  func.func @transform_4(%arg0: i32) -> (i32, i32) {
    %c0_i32 = arith.constant 0 : i32
    %c0_i32_0 = arith.constant 0 : i32
    %c0_i32_1 = arith.constant 0 : i32
    return %c0_i32, %c0_i32_0 : i32, i32
  }
  func.func @transform_5(%arg0: i32) -> (i32, i32) {
    %c0_i32 = arith.constant 0 : i32
    %c0_i32_0 = arith.constant 0 : i32
    return %c0_i32, %arg0 : i32, i32
  }
}

</mosaic_0001>

<llo_original>
// kernel: lstm_classifier_forward.1
$region0: #{lstm_classifier_forward.1}
  #allocation0 [shape = 'u32[]', space=smem, size = 0x4, offset = 0x4, fixed_abs, tag = 'smem constant byte address 0x4 - core index']
  #allocation1 [shape = 'u32[144,128]{1,0:T(1,128)}', space=vmem, size = 0x12000, scoped, tag = 'internal scratch']
  %s0 = inlined_call_operand.vmem [shape: bf16[16,128], index: 0, kind: input, shape index: {}]
  %s1 = inlined_call_operand.vmem [shape: bf16[128,16], index: 1, kind: input, shape index: {}]
  %s2 = inlined_call_operand.vmem [shape: bf16[128,32], index: 2, kind: input, shape index: {}]
  %s3 = inlined_call_operand.vmem [shape: bf16[8,32], index: 3, kind: input, shape index: {}]
  %s4 = inlined_call_operand.vmem [shape: f32[128,8], index: 4, kind: input, shape index: {}]
  %s5 = inlined_call_operand.vmem [shape: f32[8,128], index: 5, kind: output, shape index: {}]
  %s6 = sld [smem:[#allocation0]]
  $region30: #{lstm_classifier_forward.1} parent=0
    _
  %s8 = ssub.s32 1, %s6
  %s9 = scalar_select 0, %s8, %s6
  // Predicated region
  $region2: #{lstm_classifier_forward.1} parent=0 // pred_check
    _
  $region3: #{lstm_classifier_forward.1} parent=0 // pred_check_branch
    %11 = sbr.rel (0) target = $region5
  $region4: #{lstm_classifier_forward.1} parent=0 // pred_region
    _
  $region5: #{lstm_classifier_forward.1} parent=0 // pred_fallthru
    _
  // Predicated region
  $region6: #{lstm_classifier_forward.1} parent=0 // pred_check
    _
  $region7: #{lstm_classifier_forward.1} parent=0 // pred_check_branch
    %13 = sbr.rel (0) target = $region9
  $region8: #{lstm_classifier_forward.1} parent=0 // pred_region
    _
  $region9: #{lstm_classifier_forward.1} parent=0 // pred_fallthru
    _
  // Predicated region
  $region10: #{lstm_classifier_forward.1} parent=0 // pred_check
    _
  $region11: #{lstm_classifier_forward.1} parent=0 // pred_check_branch
    %15 = sbr.rel (0) target = $region13
  $region12: #{lstm_classifier_forward.1} parent=0 // pred_region
    _
  $region13: #{lstm_classifier_forward.1} parent=0 // pred_fallthru
    _
  // Predicated region
  $region14: #{lstm_classifier_forward.1} parent=0 // pred_check
    _
  $region15: #{lstm_classifier_forward.1} parent=0 // pred_check_branch
    %17 = sbr.rel (0) target = $region17
  $region16: #{lstm_classifier_forward.1} parent=0 // pred_region
    _
  $region17: #{lstm_classifier_forward.1} parent=0 // pred_fallthru
    _
  // Predicated region
  $region18: #{lstm_classifier_forward.1} parent=0 // pred_check
    _
  $region19: #{lstm_classifier_forward.1} parent=0 // pred_check_branch
    %19 = sbr.rel (0) target = $region21
  $region20: #{lstm_classifier_forward.1} parent=0 // pred_region
    _
  $region21: #{lstm_classifier_forward.1} parent=0 // pred_fallthru
    _
  %v21 = vld [vmem:[%s4] sm:$0xff]
  %v22 = vld [vmem:[%s4 + $0x8] sm:$0xff]
  %v23 = vld [vmem:[%s4 + $0x10] sm:$0xff]
  %v24 = vld [vmem:[%s4 + $0x18] sm:$0xff]
  %v25 = vld [vmem:[%s4 + $0x20] sm:$0xff]
  %v26 = vld [vmem:[%s4 + $0x28] sm:$0xff]
  %v27 = vld [vmem:[%s4 + $0x30] sm:$0xff]
  %v28 = vld [vmem:[%s4 + $0x38] sm:$0xff]
  %v29 = vld [vmem:[%s4 + $0x40] sm:$0xff]
  %v30 = vld [vmem:[%s4 + $0x48] sm:$0xff]
  %v31 = vld [vmem:[%s4 + $0x50] sm:$0xff]
  %v32 = vld [vmem:[%s4 + $0x58] sm:$0xff]
  %v33 = vld [vmem:[%s4 + $0x60] sm:$0xff]
  %v34 = vld [vmem:[%s4 + $0x68] sm:$0xff]
  %v35 = vld [vmem:[%s4 + $0x70] sm:$0xff]
  %v36 = vld [vmem:[%s4 + $0x78] sm:$0xff]
  %v37 = vld [vmem:[%s1] sm:$0xf]
  %v38 = vld [vmem:[%s1 + $0x4] sm:$0xf]
  %v39 = vld [vmem:[%s1 + $0x8] sm:$0xf]
  %v40 = vld [vmem:[%s1 + $0xc] sm:$0xf]
  %v41 = vld [vmem:[%s1 + $0x10] sm:$0xf]
  %v42 = vld [vmem:[%s1 + $0x14] sm:$0xf]
  %v43 = vld [vmem:[%s1 + $0x18] sm:$0xf]
  %v44 = vld [vmem:[%s1 + $0x1c] sm:$0xf]
  %v45 = vld [vmem:[%s1 + $0x20] sm:$0xf]
  %v46 = vld [vmem:[%s1 + $0x24] sm:$0xf]
  %v47 = vld [vmem:[%s1 + $0x28] sm:$0xf]
  %v48 = vld [vmem:[%s1 + $0x2c] sm:$0xf]
  %v49 = vld [vmem:[%s1 + $0x30] sm:$0xf]
  %v50 = vld [vmem:[%s1 + $0x34] sm:$0xf]
  %v51 = vld [vmem:[%s1 + $0x38] sm:$0xf]
  %v52 = vld [vmem:[%s1 + $0x3c] sm:$0xf]
  %v53 = vld [vmem:[%s0] sm:$0xf]
  %v54 = vld [vmem:[%s0 + $0x4] sm:$0xf]
  %56 = vset.pattern.permute.xlu0 0
  %57 = vperm.xlu0 %56, %v21
  %v58 = vpop.permute.xlu0 %57
  %61 = vset.pattern.permute.xlu0 0
  %62 = vperm.xlu0 %61, %v22
  %v63 = vpop.permute.xlu0 %62
  %66 = vset.pattern.permute.xlu0 0
  %67 = vperm.xlu0 %66, %v23
  %v68 = vpop.permute.xlu0 %67
  %71 = vset.pattern.permute.xlu0 0
  %72 = vperm.xlu0 %71, %v24
  %v73 = vpop.permute.xlu0 %72
  %76 = vset.pattern.permute.xlu0 0
  %77 = vperm.xlu0 %76, %v25
  %v78 = vpop.permute.xlu0 %77
  %80 = vset.pattern.permute.xlu0 0
  %81 = vperm.xlu0 %80, %v26
  %v82 = vpop.permute.xlu0 %81
  %84 = vset.pattern.permute.xlu0 0
  %85 = vperm.xlu0 %84, %v27
  %v86 = vpop.permute.xlu0 %85
  %88 = vset.pattern.permute.xlu0 0
  %89 = vperm.xlu0 %88, %v28
  %v90 = vpop.permute.xlu0 %89
  %92 = vset.pattern.permute.xlu0 0
  %93 = vperm.xlu0 %92, %v29
  %v94 = vpop.permute.xlu0 %93
  %97 = vset.pattern.permute.xlu0 0
  %98 = vperm.xlu0 %97, %v30
  %v99 = vpop.permute.xlu0 %98
  %102 = vset.pattern.permute.xlu0 0
  %103 = vperm.xlu0 %102, %v31
  %v104 = vpop.permute.xlu0 %103
  %107 = vset.pattern.permute.xlu0 0
  %108 = vperm.xlu0 %107, %v32
  %v109 = vpop.permute.xlu0 %108
  %112 = vset.pattern.permute.xlu0 0
  %113 = vperm.xlu0 %112, %v33
  %v114 = vpop.permute.xlu0 %113
  %117 = vset.pattern.permute.xlu0 0
  %118 = vperm.xlu0 %117, %v34
  %v119 = vpop.permute.xlu0 %118
  %122 = vset.pattern.permute.xlu0 0
  %123 = vperm.xlu0 %122, %v35
  %v124 = vpop.permute.xlu0 %123
  %127 = vset.pattern.permute.xlu0 0
  %128 = vperm.xlu0 %127, %v36
  %v129 = vpop.permute.xlu0 %128
  %v147 = vunpack.c.l.b16 %v37
  %v148 = vunpack.c.l.b16 %v38
  %v149 = vunpack.c.l.b16 %v39
  %v150 = vunpack.c.l.b16 %v40
  %v151 = vunpack.c.l.b16 %v41
  %v152 = vunpack.c.l.b16 %v42
  %v153 = vunpack.c.l.b16 %v43
  %v154 = vunpack.c.l.b16 %v44
  %v155 = vunpack.c.l.b16 %v45
  %v156 = vunpack.c.l.b16 %v46
  %v157 = vunpack.c.l.b16 %v47
  %v158 = vunpack.c.l.b16 %v48
  %v159 = vunpack.c.l.b16 %v49
  %v160 = vunpack.c.l.b16 %v50
  %v161 = vunpack.c.l.b16 %v51
  %v162 = vunpack.c.l.b16 %v52
  %v163 = vpack.c.b16 %v148, %v147
  %v164 = vpack.c.b16 %v150, %v149
  %v165 = vpack.c.b16 %v152, %v151
  %v166 = vpack.c.b16 %v154, %v153
  %v167 = vpack.c.b16 %v156, %v155
  %v168 = vpack.c.b16 %v158, %v157
  %v169 = vpack.c.b16 %v160, %v159
  %v170 = vpack.c.b16 %v162, %v161
  %v173 = vunpack.c.l.b16 %v53
  %v174 = vunpack.c.l.b16 %v54
  %v175 = vpack.c.b16 %v174, %v173
  %vm177 = vcmask 130048
  %v179 = vsel %vm177, %v163, 0
  %v182 = vsel %vm177, %v164, 0
  %v185 = vsel %vm177, %v165, 0
  %v188 = vsel %vm177, %v166, 0
  %v191 = vsel %vm177, %v167, 0
  %v194 = vsel %vm177, %v168, 0
  %v197 = vsel %vm177, %v169, 0
  %v200 = vsel %vm177, %v170, 0
  %202 = vmatprep.subr.bf16.mxu0 0
  %203 = vmatpush1.bf16.msra.mxu0 %v175
  %204 = vmatprep.subr.bf16.mxu0 0
  %205 = vmatpush1.bf16.msra.mxu0 0
  %206 = vmatprep.subr.bf16.mxu0 0
  %207 = vmatpush1.bf16.msra.mxu0 0
  %208 = vmatprep.subr.bf16.mxu0 0
  %209 = vmatpush1.bf16.msra.mxu0 0
  %210 = vmatprep.subr.bf16.mxu0 0
  %211 = vmatpush1.bf16.msra.mxu0 0
  %212 = vmatprep.subr.bf16.mxu0 0
  %213 = vmatpush1.bf16.msra.mxu0 0
  %214 = vmatprep.subr.bf16.mxu0 0
  %215 = vmatpush1.bf16.msra.mxu0 0
  %216 = vmatprep.subr.bf16.mxu0 0
  %217 = vmatpush1.bf16.msra.mxu0 0
  %218 = vmatprep.subr.bf16.mxu0 0
  %219 = vmatpush1.bf16.msra.mxu0 0
  %220 = vmatprep.subr.bf16.mxu0 0
  %221 = vmatpush1.bf16.msra.mxu0 0
  %222 = vmatprep.subr.bf16.mxu0 0
  %223 = vmatpush1.bf16.msra.mxu0 0
  %224 = vmatprep.subr.bf16.mxu0 0
  %225 = vmatpush1.bf16.msra.mxu0 0
  %226 = vmatprep.subr.bf16.mxu0 0
  %227 = vmatpush1.bf16.msra.mxu0 0
  %228 = vmatprep.subr.bf16.mxu0 0
  %229 = vmatpush1.bf16.msra.mxu0 0
  %230 = vmatprep.subr.bf16.mxu0 0
  %231 = vmatpush1.bf16.msra.mxu0 0
  %232 = vmatprep.subr.bf16.mxu0 0
  %233 = vmatpush1.bf16.msra.mxu0 0
  %234 = vmatprep.mubr.bf16.mxu0 0
  %235 = vmatmul.mubr.bf16.gmra.mrb[0].mxu0 %v179
  %v236 = vpop.f32.mrb[0].mxu0
  %v237 = vadd.f32 %v58, %v236
  %v238 = vpop.f32.mrb[0].mxu0
  %v239 = vpop.f32.mrb[0].mxu0
  %v240 = vadd.f32 %v63, %v239
  %v241 = vpop.f32.mrb[0].mxu0
  %242 = vmatprep.mubr.bf16.mxu0 0
  %243 = vmatmul.mubr.bf16.gmra.mrb[0].mxu0 %v182
  %v244 = vpop.f32.mrb[0].mxu0
  %v245 = vadd.f32 %v68, %v244
  %v246 = vpop.f32.mrb[0].mxu0
  %v247 = vpop.f32.mrb[0].mxu0
  %v248 = vadd.f32 %v73, %v247
  %v249 = vpop.f32.mrb[0].mxu0
  %250 = vmatprep.mubr.bf16.mxu0 0
  %251 = vmatmul.mubr.bf16.gmra.mrb[0].mxu0 %v185
  %v252 = vpop.f32.mrb[0].mxu0
  %v253 = vpop.f32.mrb[0].mxu0
  %v254 = vpop.f32.mrb[0].mxu0
  %v255 = vpop.f32.mrb[0].mxu0
  %256 = vmatprep.mubr.bf16.mxu0 0
  %257 = vmatmul.mubr.bf16.gmra.mrb[0].mxu0 %v188
  %v258 = vpop.f32.mrb[0].mxu0
  %v259 = vpop.f32.mrb[0].mxu0
  %v260 = vpop.f32.mrb[0].mxu0
  %v261 = vpop.f32.mrb[0].mxu0
  %262 = vmatprep.mubr.bf16.mxu0 0
  %263 = vmatmul.mubr.bf16.gmra.mrb[0].mxu0 %v191
  %v264 = vpop.f32.mrb[0].mxu0
  %v265 = vadd.f32 %v94, %v264
  %v266 = vpop.f32.mrb[0].mxu0
  %v267 = vpop.f32.mrb[0].mxu0
  %v268 = vadd.f32 %v99, %v267
  %v269 = vpop.f32.mrb[0].mxu0
  %270 = vmatprep.mubr.bf16.mxu0 0
  %271 = vmatmul.mubr.bf16.gmra.mrb[0].mxu0 %v194
  %v272 = vpop.f32.mrb[0].mxu0
  %v273 = vadd.f32 %v104, %v272
  %v274 = vpop.f32.mrb[0].mxu0
  %v275 = vpop.f32.mrb[0].mxu0
  %v276 = vadd.f32 %v109, %v275
  %v277 = vpop.f32.mrb[0].mxu0
  %278 = vmatprep.mubr.bf16.mxu0 0
  %279 = vmatmul.mubr.bf16.gmra.mrb[0].mxu0 %v197
  %v280 = vpop.f32.mrb[0].mxu0
  %v281 = vadd.f32 %v114, %v280
  %v282 = vpop.f32.mrb[0].mxu0
  %v283 = vpop.f32.mrb[0].mxu0
  %v284 = vadd.f32 %v119, %v283
  %v285 = vpop.f32.mrb[0].mxu0
  %286 = vmatprep.mubr.bf16.mxu0 0
  %287 = vmatmul.mubr.bf16.gmra.mrb[0].mxu0 %v200
  %v288 = vpop.f32.mrb[0].mxu0
  %v289 = vadd.f32 %v124, %v288
  %v290 = vpop.f32.mrb[0].mxu0
  %v291 = vpop.f32.mrb[0].mxu0
  %v292 = vadd.f32 %v129, %v291
  %v293 = vpop.f32.mrb[0].mxu0
  %294 = vdwg.mxu0
  %v295 = vxor.u32 %v237, 2147483648
  %v296 = vxor.u32 %v240, 2147483648
  %v297 = vxor.u32 %v245, 2147483648
  %v298 = vxor.u32 %v248, 2147483648
  %v299 = vmul.f32 %v295, 1.442695
  %v300 = vpow.pop %v299
  %v301 = vmul.f32 %v296, 1.442695
  %v302 = vpow.pop %v301
  %v303 = vmul.f32 %v297, 1.442695
  %v304 = vpow.pop %v303
  %v305 = vmul.f32 %v298, 1.442695
  %v306 = vpow.pop %v305
  %v307 = vadd.f32 %v300, 1.0
  %v308 = vadd.f32 %v302, 1.0
  %v309 = vadd.f32 %v304, 1.0
  %v310 = vadd.f32 %v306, 1.0
  %v311 = vrcp.pop %v307
  %v312 = vmul.f32 1.0, %v311
  %v313 = vrcp.pop %v308
  %v314 = vmul.f32 1.0, %v313
  %v315 = vrcp.pop %v309
  %v316 = vmul.f32 1.0, %v315
  %v317 = vrcp.pop %v310
  %v318 = vmul.f32 1.0, %v317
  %v319 = vtanh.pop %v265
  %v320 = vtanh.pop %v268
  %v321 = vtanh.pop %v273
  %v322 = vtanh.pop %v276
  %v323 = vxor.u32 %v281, 2147483648
  %v324 = vxor.u32 %v284, 2147483648
  %v325 = vxor.u32 %v289, 2147483648
  %v326 = vxor.u32 %v292, 2147483648
  %v327 = vmul.f32 %v323, 1.442695
  %v328 = vpow.pop %v327
  %v329 = vmul.f32 %v324, 1.442695
  %v330 = vpow.pop %v329
  %v331 = vmul.f32 %v325, 1.442695
  %v332 = vpow.pop %v331
  %v333 = vmul.f32 %v326, 1.442695
  %v334 = vpow.pop %v333
  %v335 = vadd.f32 %v328, 1.0
  %v336 = vadd.f32 %v330, 1.0
  %v337 = vadd.f32 %v332, 1.0
  %v338 = vadd.f32 %v334, 1.0
  %v339 = vrcp.pop %v335
  %v340 = vmul.f32 1.0, %v339
  %v341 = vrcp.pop %v336
  %v342 = vmul.f32 1.0, %v341
  %v343 = vrcp.pop %v337
  %v344 = vmul.f32 1.0, %v343
  %v345 = vrcp.pop %v338
  %v346 = vmul.f32 1.0, %v345
  %v347 = vmul.f32 %v312, %v319
  %v348 = vmul.f32 %v314, %v320
  %v349 = vmul.f32 %v316, %v321
  %v350 = vmul.f32 %v318, %v322
  %v351 = vtanh.pop %v347
  %v352 = vtanh.pop %v348
  %v353 = vtanh.pop %v349
  %v354 = vtanh.pop %v350
  %v355 = vmul.f32 %v340, %v351
  %v356 = vmul.f32 %v342, %v352
  %v357 = vmul.f32 %v344, %v353
  %v358 = vmul.f32 %v346, %v354
  %v359 = vld [vmem:[%s2] sm:$0xf]
  %v360 = vld [vmem:[%s2 + $0x4] sm:$0xf]
  %v361 = vld [vmem:[%s2 + $0x8] sm:$0xf]
  %v362 = vld [vmem:[%s2 + $0xc] sm:$0xf]
  %v363 = vld [vmem:[%s2 + $0x10] sm:$0xf]
  %v364 = vld [vmem:[%s2 + $0x14] sm:$0xf]
  %v365 = vld [vmem:[%s2 + $0x18] sm:$0xf]
  %v366 = vld [vmem:[%s2 + $0x1c] sm:$0xf]
  %v367 = vld [vmem:[%s2 + $0x20] sm:$0xf]
  %v368 = vld [vmem:[%s2 + $0x24] sm:$0xf]
  %v369 = vld [vmem:[%s2 + $0x28] sm:$0xf]
  %v370 = vld [vmem:[%s2 + $0x2c] sm:$0xf]
  %v371 = vld [vmem:[%s2 + $0x30] sm:$0xf]
  %v372 = vld [vmem:[%s2 + $0x34] sm:$0xf]
  %v373 = vld [vmem:[%s2 + $0x38] sm:$0xf]
  %v374 = vld [vmem:[%s2 + $0x3c] sm:$0xf]
  %v375 = vpack.c.bf16 %v356, %v355
  %v376 = vpack.c.bf16 %v358, %v357
  %377 = vset.pattern.permute.xlu0 1
  %378 = vperm.xlu0 %377, %v21
  %v379 = vpop.permute.xlu0 %378
  %381 = vset.pattern.permute.xlu0 1
  %382 = vperm.xlu0 %381, %v22
  %v383 = vpop.permute.xlu0 %382
  %385 = vset.pattern.permute.xlu0 1
  %386 = vperm.xlu0 %385, %v23
  %v387 = vpop.permute.xlu0 %386
  %389 = vset.pattern.permute.xlu0 1
  %390 = vperm.xlu0 %389, %v24
  %v391 = vpop.permute.xlu0 %390
  %393 = vset.pattern.permute.xlu0 1
  %394 = vperm.xlu0 %393, %v25
  %v395 = vpop.permute.xlu0 %394
  %396 = vset.pattern.permute.xlu0 1
  %397 = vperm.xlu0 %396, %v26
  %v398 = vpop.permute.xlu0 %397
  %399 = vset.pattern.permute.xlu0 1
  %400 = vperm.xlu0 %399, %v27
  %v401 = vpop.permute.xlu0 %400
  %402 = vset.pattern.permute.xlu0 1
  %403 = vperm.xlu0 %402, %v28
  %v404 = vpop.permute.xlu0 %403
  %405 = vset.pattern.permute.xlu0 1
  %406 = vperm.xlu0 %405, %v29
  %v407 = vpop.permute.xlu0 %406
  %409 = vset.pattern.permute.xlu0 1
  %410 = vperm.xlu0 %409, %v30
  %v411 = vpop.permute.xlu0 %410
  %413 = vset.pattern.permute.xlu0 1
  %414 = vperm.xlu0 %413, %v31
  %v415 = vpop.permute.xlu0 %414
  %417 = vset.pattern.permute.xlu0 1
  %418 = vperm.xlu0 %417, %v32
  %v419 = vpop.permute.xlu0 %418
  %421 = vset.pattern.permute.xlu0 1
  %422 = vperm.xlu0 %421, %v33
  %v423 = vpop.permute.xlu0 %422
  %425 = vset.pattern.permute.xlu0 1
  %426 = vperm.xlu0 %425, %v34
  %v427 = vpop.permute.xlu0 %426
  %429 = vset.pattern.permute.xlu0 1
  %430 = vperm.xlu0 %429, %v35
  %v431 = vpop.permute.xlu0 %430
  %433 = vset.pattern.permute.xlu0 1
  %434 = vperm.xlu0 %433, %v36
  %v435 = vpop.permute.xlu0 %434
  %v453 = vunpack.c.l.b16 %v359
  %v454 = vunpack.c.l.b16 %v360
  %v455 = vunpack.c.l.b16 %v361
  %v456 = vunpack.c.l.b16 %v362
  %v457 = vunpack.c.l.b16 %v363
  %v458 = vunpack.c.l.b16 %v364
  %v459 = vunpack.c.l.b16 %v365
  %v460 = vunpack.c.l.b16 %v366
  %v461 = vunpack.c.l.b16 %v367
  %v462 = vunpack.c.l.b16 %v368
  %v463 = vunpack.c.l.b16 %v369
  %v464 = vunpack.c.l.b16 %v370
  %v465 = vunpack.c.l.b16 %v371
  %v466 = vunpack.c.l.b16 %v372
  %v467 = vunpack.c.l.b16 %v373
  %v468 = vunpack.c.l.b16 %v374
  %v469 = vpack.c.b16 %v454, %v453
  %v470 = vpack.c.b16 %v456, %v455
  %v471 = vpack.c.b16 %v458, %v457
  %v472 = vpack.c.b16 %v460, %v459
  %v473 = vpack.c.b16 %v462, %v461
  %v474 = vpack.c.b16 %v464, %v463
  %v475 = vpack.c.b16 %v466, %v465
  %v476 = vpack.c.b16 %v468, %v467
  %vm477 = vcmask 261120
  %v479 = vsel %vm477, %v469, 0
  %v482 = vsel %vm477, %v470, 0
  %v485 = vsel %vm477, %v471, 0
  %v488 = vsel %vm477, %v472, 0
  %v491 = vsel %vm477, %v473, 0
  %v494 = vsel %vm477, %v474, 0
  %v497 = vsel %vm477, %v475, 0
  %v500 = vsel %vm477, %v476, 0
  %502 = vmatprep.subr.bf16.mxu0 0
  %503 = vmatpush1.bf16.msra.mxu0 %v375
  %504 = vmatprep.subr.bf16.mxu0 0
  %505 = vmatpush1.bf16.msra.mxu0 %v376
  %506 = vmatprep.subr.bf16.mxu0 0
  %507 = vmatpush1.bf16.msra.mxu0 0
  %508 = vmatprep.subr.bf16.mxu0 0
  %509 = vmatpush1.bf16.msra.mxu0 0
  %510 = vmatprep.subr.bf16.mxu0 0
  %511 = vmatpush1.bf16.msra.mxu0 0
  %512 = vmatprep.subr.bf16.mxu0 0
  %513 = vmatpush1.bf16.msra.mxu0 0
  %514 = vmatprep.subr.bf16.mxu0 0
  %515 = vmatpush1.bf16.msra.mxu0 0
  %516 = vmatprep.subr.bf16.mxu0 0
  %517 = vmatpush1.bf16.msra.mxu0 0
  %518 = vmatprep.subr.bf16.mxu0 0
  %519 = vmatpush1.bf16.msra.mxu0 0
  %520 = vmatprep.subr.bf16.mxu0 0
  %521 = vmatpush1.bf16.msra.mxu0 0
  %522 = vmatprep.subr.bf16.mxu0 0
  %523 = vmatpush1.bf16.msra.mxu0 0
  %524 = vmatprep.subr.bf16.mxu0 0
  %525 = vmatpush1.bf16.msra.mxu0 0
  %526 = vmatprep.subr.bf16.mxu0 0
  %527 = vmatpush1.bf16.msra.mxu0 0
  %528 = vmatprep.subr.bf16.mxu0 0
  %529 = vmatpush1.bf16.msra.mxu0 0
  %530 = vmatprep.subr.bf16.mxu0 0
  %531 = vmatpush1.bf16.msra.mxu0 0
  %532 = vmatprep.subr.bf16.mxu0 0
  %533 = vmatpush1.bf16.msra.mxu0 0
  %534 = vmatprep.mubr.bf16.mxu0 0
  %535 = vmatmul.mubr.bf16.gmra.mrb[0].mxu0 %v479
  %v536 = vpop.f32.mrb[0].mxu0
  %v537 = vadd.f32 %v379, %v536
  %v538 = vpop.f32.mrb[0].mxu0
  %v539 = vpop.f32.mrb[0].mxu0
  %v540 = vadd.f32 %v383, %v539
  %v541 = vpop.f32.mrb[0].mxu0
  %542 = vmatprep.mubr.bf16.mxu0 0
  %543 = vmatmul.mubr.bf16.gmra.mrb[0].mxu0 %v482
  %v544 = vpop.f32.mrb[0].mxu0
  %v545 = vadd.f32 %v387, %v544
  %v546 = vpop.f32.mrb[0].mxu0
  %v547 = vpop.f32.mrb[0].mxu0
  %v548 = vadd.f32 %v391, %v547
  %v549 = vpop.f32.mrb[0].mxu0
  %550 = vmatprep.mubr.bf16.mxu0 0
  %551 = vmatmul.mubr.bf16.gmra.mrb[0].mxu0 %v485
  %v552 = vpop.f32.mrb[0].mxu0
  %v553 = vpop.f32.mrb[0].mxu0
  %v554 = vpop.f32.mrb[0].mxu0
  %v555 = vpop.f32.mrb[0].mxu0
  %556 = vmatprep.mubr.bf16.mxu0 0
  %557 = vmatmul.mubr.bf16.gmra.mrb[0].mxu0 %v488
  %v558 = vpop.f32.mrb[0].mxu0
  %v559 = vpop.f32.mrb[0].mxu0
  %v560 = vpop.f32.mrb[0].mxu0
  %v561 = vpop.f32.mrb[0].mxu0
  %562 = vmatprep.mubr.bf16.mxu0 0
  %563 = vmatmul.mubr.bf16.gmra.mrb[0].mxu0 %v491
  %v564 = vpop.f32.mrb[0].mxu0
  %v565 = vadd.f32 %v407, %v564
  %v566 = vpop.f32.mrb[0].mxu0
  %v567 = vpop.f32.mrb[0].mxu0
  %v568 = vadd.f32 %v411, %v567
  %v569 = vpop.f32.mrb[0].mxu0
  %570 = vmatprep.mubr.bf16.mxu0 0
  %571 = vmatmul.mubr.bf16.gmra.mrb[0].mxu0 %v494
  %v572 = vpop.f32.mrb[0].mxu0
  %v573 = vadd.f32 %v415, %v572
  %v574 = vpop.f32.mrb[0].mxu0
  %v575 = vpop.f32.mrb[0].mxu0
  %v576 = vadd.f32 %v419, %v575
  %v577 = vpop.f32.mrb[0].mxu0
  %578 = vmatprep.mubr.bf16.mxu0 0
  %579 = vmatmul.mubr.bf16.gmra.mrb[0].mxu0 %v497
  %v580 = vpop.f32.mrb[0].mxu0
  %v581 = vadd.f32 %v423, %v580
  %v582 = vpop.f32.mrb[0].mxu0
  %v583 = vpop.f32.mrb[0].mxu0
  %v584 = vadd.f32 %v427, %v583
  %v585 = vpop.f32.mrb[0].mxu0
  %586 = vmatprep.mubr.bf16.mxu0 0
  %587 = vmatmul.mubr.bf16.gmra.mrb[0].mxu0 %v500
  %v588 = vpop.f32.mrb[0].mxu0
  %v589 = vadd.f32 %v431, %v588
  %v590 = vpop.f32.mrb[0].mxu0
  %v591 = vpop.f32.mrb[0].mxu0
  %v592 = vadd.f32 %v435, %v591
  %v593 = vpop.f32.mrb[0].mxu0
  %594 = vdwg.mxu0
  %v595 = vxor.u32 %v537, 2147483648
  %v596 = vxor.u32 %v540, 2147483648
  %v597 = vxor.u32 %v545, 2147483648
  %v598 = vxor.u32 %v548, 2147483648
  %v599 = vmul.f32 %v595, 1.442695
  %v600 = vpow.pop %v599
  %v601 = vmul.f32 %v596, 1.442695
  %v602 = vpow.pop %v601
  %v603 = vmul.f32 %v597, 1.442695
  %v604 = vpow.pop %v603
  %v605 = vmul.f32 %v598, 1.442695
  %v606 = vpow.pop %v605
  %v607 = vadd.f32 %v600, 1.0
  %v608 = vadd.f32 %v602, 1.0
  %v609 = vadd.f32 %v604, 1.0
  %v610 = vadd.f32 %v606, 1.0
  %v611 = vrcp.pop %v607
  %v612 = vmul.f32 1.0, %v611
  %v613 = vrcp.pop %v608
  %v614 = vmul.f32 1.0, %v613
  %v615 = vrcp.pop %v609
  %v616 = vmul.f32 1.0, %v615
  %v617 = vrcp.pop %v610
  %v618 = vmul.f32 1.0, %v617
  %v619 = vtanh.pop %v565
  %v620 = vtanh.pop %v568
  %v621 = vtanh.pop %v573
  %v622 = vtanh.pop %v576
  %v623 = vxor.u32 %v581, 2147483648
  %v624 = vxor.u32 %v584, 2147483648
  %v625 = vxor.u32 %v589, 2147483648
  %v626 = vxor.u32 %v592, 2147483648
  %v627 = vmul.f32 %v623, 1.442695
  %v628 = vpow.pop %v627
  %v629 = vmul.f32 %v624, 1.442695
  %v630 = vpow.pop %v629
  %v631 = vmul.f32 %v625, 1.442695
  %v632 = vpow.pop %v631
  %v633 = vmul.f32 %v626, 1.442695
  %v634 = vpow.pop %v633
  %v635 = vadd.f32 %v628, 1.0
  %v636 = vadd.f32 %v630, 1.0
  %v637 = vadd.f32 %v632, 1.0
  %v638 = vadd.f32 %v634, 1.0
  %v639 = vrcp.pop %v635
  %v640 = vmul.f32 1.0, %v639
  %v641 = vrcp.pop %v636
  %v642 = vmul.f32 1.0, %v641
  %v643 = vrcp.pop %v637
  %v644 = vmul.f32 1.0, %v643
  %v645 = vrcp.pop %v638
  %v646 = vmul.f32 1.0, %v645
  %v647 = vmul.f32 %v612, %v619
  %v648 = vmul.f32 %v614, %v620
  %v649 = vmul.f32 %v616, %v621
  %v650 = vmul.f32 %v618, %v622
  %v651 = vtanh.pop %v647
  %v652 = vtanh.pop %v648
  %v653 = vtanh.pop %v649
  %v654 = vtanh.pop %v650
  %v655 = vmul.f32 %v640, %v651
  %v656 = vmul.f32 %v642, %v652
  %v657 = vmul.f32 %v644, %v653
  %v658 = vmul.f32 %v646, %v654
  %v659 = vld [vmem:[%s3] sm:$0xf]
  %v660 = vpack.c.bf16 %v656, %v655
  %v661 = vpack.c.bf16 %v658, %v657
  %662 = vset.pattern.permute.xlu0 2
  %663 = vperm.xlu0 %662, %v21
  %v664 = vpop.permute.xlu0 %663
  %v667 = vsel %vm477, %v659, 0
  %669 = vmatprep.subr.bf16.mxu0 0
  %670 = vmatpush1.bf16.msra.mxu0 %v660
  %671 = vmatprep.subr.bf16.mxu0 0
  %672 = vmatpush1.bf16.msra.mxu0 %v661
  %673 = vmatprep.subr.bf16.mxu0 0
  %674 = vmatpush1.bf16.msra.mxu0 0
  %675 = vmatprep.subr.bf16.mxu0 0
  %676 = vmatpush1.bf16.msra.mxu0 0
  %677 = vmatprep.subr.bf16.mxu0 0
  %678 = vmatpush1.bf16.msra.mxu0 0
  %679 = vmatprep.subr.bf16.mxu0 0
  %680 = vmatpush1.bf16.msra.mxu0 0
  %681 = vmatprep.subr.bf16.mxu0 0
  %682 = vmatpush1.bf16.msra.mxu0 0
  %683 = vmatprep.subr.bf16.mxu0 0
  %684 = vmatpush1.bf16.msra.mxu0 0
  %685 = vmatprep.subr.bf16.mxu0 0
  %686 = vmatpush1.bf16.msra.mxu0 0
  %687 = vmatprep.subr.bf16.mxu0 0
  %688 = vmatpush1.bf16.msra.mxu0 0
  %689 = vmatprep.subr.bf16.mxu0 0
  %690 = vmatpush1.bf16.msra.mxu0 0
  %691 = vmatprep.subr.bf16.mxu0 0
  %692 = vmatpush1.bf16.msra.mxu0 0
  %693 = vmatprep.subr.bf16.mxu0 0
  %694 = vmatpush1.bf16.msra.mxu0 0
  %695 = vmatprep.subr.bf16.mxu0 0
  %696 = vmatpush1.bf16.msra.mxu0 0
  %697 = vmatprep.subr.bf16.mxu0 0
  %698 = vmatpush1.bf16.msra.mxu0 0
  %699 = vmatprep.subr.bf16.mxu0 0
  %700 = vmatpush1.bf16.msra.mxu0 0
  %701 = vmatprep.mubr.bf16.mxu0 0
  %702 = vmatmul.mubr.bf16.gmra.mrb[0].mxu0 %v667
  %v703 = vpop.f32.mrb[0].mxu0
  %v704 = vadd.f32 %v664, %v703
  %v705 = vpop.f32.mrb[0].mxu0
  %v706 = vpop.f32.mrb[0].mxu0
  %v707 = vpop.f32.mrb[0].mxu0
  %708 = vdwg.mxu0
  %709 = vst [vmem:[%s5] sm:$0xff] %v704
  // Predicated region
  $region22: #{lstm_classifier_forward.1} parent=0 // pred_check
    _
  $region23: #{lstm_classifier_forward.1} parent=0 // pred_check_branch
    %711 = sbr.rel (0) target = $region25
  $region24: #{lstm_classifier_forward.1} parent=0 // pred_region
    _
  $region25: #{lstm_classifier_forward.1} parent=0 // pred_fallthru
    _
  // Predicated region
  $region26: #{lstm_classifier_forward.1} parent=0 // pred_check
    _
  $region27: #{lstm_classifier_forward.1} parent=0 // pred_check_branch
    %713 = sbr.rel (0) target = $region29
  $region28: #{lstm_classifier_forward.1} parent=0 // pred_region
    _
  $region29: #{lstm_classifier_forward.1} parent=0 // pred_fallthru
    _

</llo_original>
